<compile_context>
chip_gen: v6e
topology: v6e:2x2x1
jax: 0.10.0
libtpu: 0.0.40
codegen_flags: <defaults>
</compile_context>

<pallas_src>
import jax
import jax.numpy as jnp
from jax.experimental import pallas as pl
from jax.experimental.pallas import tpu as pltpu

HIDDEN = 8
NEG_SLOPE = 0.2


def _round_up(n, m):
    return ((n + m - 1) // m) * m


def _leaky_relu(h):
    return jnp.where(h > 0, h, NEG_SLOPE * h)


def policy_mlp_kernel(wb_ref, x_ref, o_ref):
    """Fused 3-layer MLP on a lane-dense batch tile.

    wb_ref: (8, P) packed [W1^T | b1 | W2^T | b2 | W3^T(pad) | b3(pad)] f32
    x_ref : (state_dim, T)  batch columns in lanes
    o_ref : (action_dim, T)
    """
    S = x_ref.shape[0]          # state_dim
    T = x_ref.shape[1]          # lane tile (batch columns)
    A = o_ref.shape[0]          # action_dim
    H = HIDDEN

    wb = wb_ref[...]                          # (8, P) f32, grid-invariant
    x = x_ref[...].astype(jnp.float32)        # (S, T)

    # Packed column offsets.
    w1_off = 0
    b1_off = S
    w2_off = S + 1
    b2_off = S + 1 + H
    w3_off = S + H + 2
    b3_off = S + 2 * H + 2

    # Layer 1: h1[j, t] = b1[j] + sum_k W1[k, j] * x[k, t]   (VPU broadcast-FMAs)
    h1 = jnp.broadcast_to(wb[:, b1_off:b1_off + 1], (H, T))
    for k in range(S):
        h1 = h1 + wb[:, w1_off + k:w1_off + k + 1] * x[k:k + 1, :]
    h1 = _leaky_relu(h1)

    # Layer 2
    h2 = jnp.broadcast_to(wb[:, b2_off:b2_off + 1], (H, T))
    for k in range(H):
        h2 = h2 + wb[:, w2_off + k:w2_off + k + 1] * h1[k:k + 1, :]
    h2 = _leaky_relu(h2)

    # Layer 3 — computed on all 8 rows (rows >= A carry zero weights/bias),
    # only the first A rows are stored.
    out = jnp.broadcast_to(wb[:, b3_off:b3_off + 1], (H, T))
    for k in range(H):
        out = out + wb[:, w3_off + k:w3_off + k + 1] * h2[k:k + 1, :]

    o_ref[...] = out[:A, :].astype(o_ref.dtype)


def pack_params(params):
    """Pack (w1,b1,w2,b2,w3,b3) into one f32 (8, state_dim + 2*HIDDEN + 3) buffer.

    Columns: [W1^T | b1 | W2^T | b2 | W3^T (rows >= action_dim zeroed) | b3 (padded)].
    """
    w1, b1, w2, b2, w3, b3 = params
    A = w3.shape[1]
    H = HIDDEN

    def as_col(b, n_valid):
        v = jnp.reshape(b, (-1,)).astype(jnp.float32)
        v = jnp.pad(v, (0, H - n_valid))
        return v.reshape(H, 1)

    w1t = w1.T.astype(jnp.float32)                                  # (H, S)
    w2t = w2.T.astype(jnp.float32)                                  # (H, H)
    w3t = jnp.pad(w3.T.astype(jnp.float32), ((0, H - A), (0, 0)))   # (H, H)
    return jnp.concatenate(
        [w1t, as_col(b1, H), w2t, as_col(b2, H), w3t, as_col(b3, A)], axis=1)


def policy_model_forward(x, params, *, lane_tile=None):
    """x: (B, state_dim) -> (B, action_dim), matching the PyTorch module."""
    w1, b1, w2, b2, w3, b3 = params
    B, S = x.shape
    A = w3.shape[1]

    packed = pack_params(params)            # (8, P) f32; one DMA for all params
    P = packed.shape[1]

    # Put the batch into the lane dimension (cheap layout plumbing in XLA).
    xt = x.T                                # (S, B)

    if lane_tile is None:
        # Single grid step whenever the batch fits; 8192-wide tiles otherwise.
        lane_tile = min(8192, _round_up(max(B, 1), 128))
    lane_tile = max(128, _round_up(lane_tile, 128))

    grid = (pl.cdiv(B, lane_tile),)

    flops = 2 * B * (S * HIDDEN + HIDDEN * HIDDEN + HIDDEN * A)
    bytes_accessed = (int(x.size) * x.dtype.itemsize
                      + B * A * 4
                      + int(packed.size) * 4)

    out_t = pl.pallas_call(
        policy_mlp_kernel,
        out_shape=jax.ShapeDtypeStruct((A, B), jnp.float32),
        grid_spec=pltpu.PrefetchScalarGridSpec(
            num_scalar_prefetch=0,
            grid=grid,
            in_specs=[
                pl.BlockSpec((HIDDEN, P), lambda i: (0, 0)),      # packed w/b
                pl.BlockSpec((S, lane_tile), lambda i: (0, i)),   # x, lane-dense
            ],
            out_specs=pl.BlockSpec((A, lane_tile), lambda i: (0, i)),
        ),
        compiler_params=pltpu.CompilerParams(
            dimension_semantics=("parallel",)),
        cost_estimate=pl.CostEstimate(
            flops=flops, transcendentals=0, bytes_accessed=bytes_accessed),
    )(packed, xt)

    return out_t.T                           # (B, action_dim)


def init_params(key, state_dim, action_dim):
    """PyTorch Linear default init: U(-1/sqrt(fan_in), 1/sqrt(fan_in))."""
    ks = jax.random.split(key, 6)

    def linear(kw, kb, fan_in, fan_out):
        bound = 1.0 / jnp.sqrt(fan_in)
        w = jax.random.uniform(kw, (fan_in, fan_out), jnp.float32, -bound, bound)
        b = jax.random.uniform(kb, (fan_out,), jnp.float32, -bound, bound)
        return w, b

    w1, b1 = linear(ks[0], ks[1], state_dim, HIDDEN)
    w2, b2 = linear(ks[2], ks[3], HIDDEN, HIDDEN)
    w3, b3 = linear(ks[4], ks[5], HIDDEN, action_dim)
    return (w1, b1, w2, b2, w3, b3)


def reference_forward(x, params):
    w1, b1, w2, b2, w3, b3 = params
    h1 = x @ w1 + b1
    h1 = jnp.where(h1 > 0, h1, NEG_SLOPE * h1)
    h2 = h1 @ w2 + b2
    h2 = jnp.where(h2 > 0, h2, NEG_SLOPE * h2)
    return h2 @ w3 + b3


if __name__ == "__main__":
    key = jax.random.PRNGKey(0)
    k_params, k_x1, k_x2 = jax.random.split(key, 3)

    state_dim, action_dim = 4, 2
    params = init_params(k_params, state_dim, action_dim)

    # Small batch: one ragged 128-wide lane tile (tail lanes masked by Pallas).
    x_small = jax.random.normal(k_x1, (16, state_dim), jnp.float32)
    out_small = jax.block_until_ready(policy_model_forward(x_small, params))
    ref_small = reference_forward(x_small, params)
    assert out_small.shape == (16, action_dim)
    assert jnp.allclose(out_small, ref_small, atol=1e-4, rtol=1e-4), \
        "mismatch vs JAX reference (small batch)"

    # Batch not a multiple of 128: single 384-wide tile, no jnp.pad / slice copies.
    x_odd = jax.random.normal(k_x2, (300, state_dim), jnp.float32)
    out_odd = jax.block_until_ready(policy_model_forward(x_odd, params))
    ref_odd = reference_forward(x_odd, params)
    assert out_odd.shape == (300, action_dim)
    assert jnp.allclose(out_odd, ref_odd, atol=1e-4, rtol=1e-4), \
        "mismatch vs JAX reference (ragged batch)"

    print("KERNEL_OK")
</pallas_src>

<mosaic_0001>
module attributes {stable_mosaic.version = 11 : i64} {
  func.func @policy_mlp_kernel(%arg0: i32, %arg1: memref<8x23xf32, #tpu.memory_space<vmem>>, %arg2: memref<4x128xf32, #tpu.memory_space<vmem>>, %arg3: memref<2x128xf32, #tpu.memory_space<vmem>>) attributes {dimension_semantics = [#tpu.dimension_semantics<parallel>], iteration_bounds = array<i64: 1>, scalar_prefetch = 0 : i64, scratch_operands = 0 : i64, tpu.core_type = #tpu.core_type<tc>, window_params = [{pipeline_mode = #tpu.pipeline_mode<synchronous>, transform_indices = @transform_0, window_bounds = array<i64: 8, 23>}, {transform_indices = @transform_1, window_bounds = array<i64: 4, 128>}, {transform_indices = @transform_2, window_bounds = array<i64: 2, 128>}]} {
    %c0 = arith.constant 0 : index
    %c0_0 = arith.constant 0 : index
    %0 = vector.load %arg1[%c0, %c0_0] : memref<8x23xf32, #tpu.memory_space<vmem>>, vector<8x23xf32>
    %c0_1 = arith.constant 0 : index
    %c0_2 = arith.constant 0 : index
    %1 = vector.load %arg2[%c0_1, %c0_2] : memref<4x128xf32, #tpu.memory_space<vmem>>, vector<4x128xf32>
    %2 = vector.extract_strided_slice %0 {offsets = [0, 4], sizes = [8, 1], strides = [1, 1]} : vector<8x23xf32> to vector<8x1xf32>
    %3 = vector.shape_cast %2 : vector<8x1xf32> to vector<8x1xf32>
    %4 = vector.broadcast %3 : vector<8x1xf32> to vector<8x128xf32>
    %5 = vector.extract_strided_slice %0 {offsets = [0, 0], sizes = [8, 1], strides = [1, 1]} : vector<8x23xf32> to vector<8x1xf32>
    %6 = vector.extract_strided_slice %1 {offsets = [0, 0], sizes = [1, 128], strides = [1, 1]} : vector<4x128xf32> to vector<1x128xf32>
    %7 = vector.broadcast %5 : vector<8x1xf32> to vector<8x128xf32>
    %8 = vector.broadcast %6 : vector<1x128xf32> to vector<8x128xf32>
    %9 = arith.mulf %7, %8 : vector<8x128xf32>
    %10 = arith.addf %4, %9 : vector<8x128xf32>
    %11 = vector.extract_strided_slice %0 {offsets = [0, 1], sizes = [8, 1], strides = [1, 1]} : vector<8x23xf32> to vector<8x1xf32>
    %12 = vector.extract_strided_slice %1 {offsets = [1, 0], sizes = [1, 128], strides = [1, 1]} : vector<4x128xf32> to vector<1x128xf32>
    %13 = vector.broadcast %11 : vector<8x1xf32> to vector<8x128xf32>
    %14 = vector.broadcast %12 : vector<1x128xf32> to vector<8x128xf32>
    %15 = arith.mulf %13, %14 : vector<8x128xf32>
    %16 = arith.addf %10, %15 : vector<8x128xf32>
    %17 = vector.extract_strided_slice %0 {offsets = [0, 2], sizes = [8, 1], strides = [1, 1]} : vector<8x23xf32> to vector<8x1xf32>
    %18 = vector.extract_strided_slice %1 {offsets = [2, 0], sizes = [1, 128], strides = [1, 1]} : vector<4x128xf32> to vector<1x128xf32>
    %19 = vector.broadcast %17 : vector<8x1xf32> to vector<8x128xf32>
    %20 = vector.broadcast %18 : vector<1x128xf32> to vector<8x128xf32>
    %21 = arith.mulf %19, %20 : vector<8x128xf32>
    %22 = arith.addf %16, %21 : vector<8x128xf32>
    %23 = vector.extract_strided_slice %0 {offsets = [0, 3], sizes = [8, 1], strides = [1, 1]} : vector<8x23xf32> to vector<8x1xf32>
    %24 = vector.extract_strided_slice %1 {offsets = [3, 0], sizes = [1, 128], strides = [1, 1]} : vector<4x128xf32> to vector<1x128xf32>
    %25 = vector.broadcast %23 : vector<8x1xf32> to vector<8x128xf32>
    %26 = vector.broadcast %24 : vector<1x128xf32> to vector<8x128xf32>
    %27 = arith.mulf %25, %26 : vector<8x128xf32>
    %28 = arith.addf %22, %27 : vector<8x128xf32>
    %cst = arith.constant 0.000000e+00 : f32
    %29 = vector.broadcast %cst : f32 to vector<8x128xf32>
    %30 = arith.cmpf ogt, %28, %29 : vector<8x128xf32>
    %cst_3 = arith.constant 2.000000e-01 : f32
    %31 = vector.broadcast %cst_3 : f32 to vector<8x128xf32>
    %32 = arith.mulf %31, %28 : vector<8x128xf32>
    %33 = arith.select %30, %28, %32 : vector<8x128xi1>, vector<8x128xf32>
    %34 = vector.extract_strided_slice %0 {offsets = [0, 13], sizes = [8, 1], strides = [1, 1]} : vector<8x23xf32> to vector<8x1xf32>
    %35 = vector.shape_cast %34 : vector<8x1xf32> to vector<8x1xf32>
    %36 = vector.broadcast %35 : vector<8x1xf32> to vector<8x128xf32>
    %37 = vector.extract_strided_slice %0 {offsets = [0, 5], sizes = [8, 1], strides = [1, 1]} : vector<8x23xf32> to vector<8x1xf32>
    %38 = vector.extract_strided_slice %33 {offsets = [0, 0], sizes = [1, 128], strides = [1, 1]} : vector<8x128xf32> to vector<1x128xf32>
    %39 = vector.broadcast %37 : vector<8x1xf32> to vector<8x128xf32>
    %40 = vector.broadcast %38 : vector<1x128xf32> to vector<8x128xf32>
    %41 = arith.mulf %39, %40 : vector<8x128xf32>
    %42 = arith.addf %36, %41 : vector<8x128xf32>
    %43 = vector.extract_strided_slice %0 {offsets = [0, 6], sizes = [8, 1], strides = [1, 1]} : vector<8x23xf32> to vector<8x1xf32>
    %44 = vector.extract_strided_slice %33 {offsets = [1, 0], sizes = [1, 128], strides = [1, 1]} : vector<8x128xf32> to vector<1x128xf32>
    %45 = vector.broadcast %43 : vector<8x1xf32> to vector<8x128xf32>
    %46 = vector.broadcast %44 : vector<1x128xf32> to vector<8x128xf32>
    %47 = arith.mulf %45, %46 : vector<8x128xf32>
    %48 = arith.addf %42, %47 : vector<8x128xf32>
    %49 = vector.extract_strided_slice %0 {offsets = [0, 7], sizes = [8, 1], strides = [1, 1]} : vector<8x23xf32> to vector<8x1xf32>
    %50 = vector.extract_strided_slice %33 {offsets = [2, 0], sizes = [1, 128], strides = [1, 1]} : vector<8x128xf32> to vector<1x128xf32>
    %51 = vector.broadcast %49 : vector<8x1xf32> to vector<8x128xf32>
    %52 = vector.broadcast %50 : vector<1x128xf32> to vector<8x128xf32>
    %53 = arith.mulf %51, %52 : vector<8x128xf32>
    %54 = arith.addf %48, %53 : vector<8x128xf32>
    %55 = vector.extract_strided_slice %0 {offsets = [0, 8], sizes = [8, 1], strides = [1, 1]} : vector<8x23xf32> to vector<8x1xf32>
    %56 = vector.extract_strided_slice %33 {offsets = [3, 0], sizes = [1, 128], strides = [1, 1]} : vector<8x128xf32> to vector<1x128xf32>
    %57 = vector.broadcast %55 : vector<8x1xf32> to vector<8x128xf32>
    %58 = vector.broadcast %56 : vector<1x128xf32> to vector<8x128xf32>
    %59 = arith.mulf %57, %58 : vector<8x128xf32>
    %60 = arith.addf %54, %59 : vector<8x128xf32>
    %61 = vector.extract_strided_slice %0 {offsets = [0, 9], sizes = [8, 1], strides = [1, 1]} : vector<8x23xf32> to vector<8x1xf32>
    %62 = vector.extract_strided_slice %33 {offsets = [4, 0], sizes = [1, 128], strides = [1, 1]} : vector<8x128xf32> to vector<1x128xf32>
    %63 = vector.broadcast %61 : vector<8x1xf32> to vector<8x128xf32>
    %64 = vector.broadcast %62 : vector<1x128xf32> to vector<8x128xf32>
    %65 = arith.mulf %63, %64 : vector<8x128xf32>
    %66 = arith.addf %60, %65 : vector<8x128xf32>
    %67 = vector.extract_strided_slice %0 {offsets = [0, 10], sizes = [8, 1], strides = [1, 1]} : vector<8x23xf32> to vector<8x1xf32>
    %68 = vector.extract_strided_slice %33 {offsets = [5, 0], sizes = [1, 128], strides = [1, 1]} : vector<8x128xf32> to vector<1x128xf32>
    %69 = vector.broadcast %67 : vector<8x1xf32> to vector<8x128xf32>
    %70 = vector.broadcast %68 : vector<1x128xf32> to vector<8x128xf32>
    %71 = arith.mulf %69, %70 : vector<8x128xf32>
    %72 = arith.addf %66, %71 : vector<8x128xf32>
    %73 = vector.extract_strided_slice %0 {offsets = [0, 11], sizes = [8, 1], strides = [1, 1]} : vector<8x23xf32> to vector<8x1xf32>
    %74 = vector.extract_strided_slice %33 {offsets = [6, 0], sizes = [1, 128], strides = [1, 1]} : vector<8x128xf32> to vector<1x128xf32>
    %75 = vector.broadcast %73 : vector<8x1xf32> to vector<8x128xf32>
    %76 = vector.broadcast %74 : vector<1x128xf32> to vector<8x128xf32>
    %77 = arith.mulf %75, %76 : vector<8x128xf32>
    %78 = arith.addf %72, %77 : vector<8x128xf32>
    %79 = vector.extract_strided_slice %0 {offsets = [0, 12], sizes = [8, 1], strides = [1, 1]} : vector<8x23xf32> to vector<8x1xf32>
    %80 = vector.extract_strided_slice %33 {offsets = [7, 0], sizes = [1, 128], strides = [1, 1]} : vector<8x128xf32> to vector<1x128xf32>
    %81 = vector.broadcast %79 : vector<8x1xf32> to vector<8x128xf32>
    %82 = vector.broadcast %80 : vector<1x128xf32> to vector<8x128xf32>
    %83 = arith.mulf %81, %82 : vector<8x128xf32>
    %84 = arith.addf %78, %83 : vector<8x128xf32>
    %cst_4 = arith.constant 0.000000e+00 : f32
    %85 = vector.broadcast %cst_4 : f32 to vector<8x128xf32>
    %86 = arith.cmpf ogt, %84, %85 : vector<8x128xf32>
    %cst_5 = arith.constant 2.000000e-01 : f32
    %87 = vector.broadcast %cst_5 : f32 to vector<8x128xf32>
    %88 = arith.mulf %87, %84 : vector<8x128xf32>
    %89 = arith.select %86, %84, %88 : vector<8x128xi1>, vector<8x128xf32>
    %90 = vector.extract_strided_slice %0 {offsets = [0, 22], sizes = [8, 1], strides = [1, 1]} : vector<8x23xf32> to vector<8x1xf32>
    %91 = vector.shape_cast %90 : vector<8x1xf32> to vector<8x1xf32>
    %92 = vector.broadcast %91 : vector<8x1xf32> to vector<8x128xf32>
    %93 = vector.extract_strided_slice %0 {offsets = [0, 14], sizes = [8, 1], strides = [1, 1]} : vector<8x23xf32> to vector<8x1xf32>
    %94 = vector.extract_strided_slice %89 {offsets = [0, 0], sizes = [1, 128], strides = [1, 1]} : vector<8x128xf32> to vector<1x128xf32>
    %95 = vector.broadcast %93 : vector<8x1xf32> to vector<8x128xf32>
    %96 = vector.broadcast %94 : vector<1x128xf32> to vector<8x128xf32>
    %97 = arith.mulf %95, %96 : vector<8x128xf32>
    %98 = arith.addf %92, %97 : vector<8x128xf32>
    %99 = vector.extract_strided_slice %0 {offsets = [0, 15], sizes = [8, 1], strides = [1, 1]} : vector<8x23xf32> to vector<8x1xf32>
    %100 = vector.extract_strided_slice %89 {offsets = [1, 0], sizes = [1, 128], strides = [1, 1]} : vector<8x128xf32> to vector<1x128xf32>
    %101 = vector.broadcast %99 : vector<8x1xf32> to vector<8x128xf32>
    %102 = vector.broadcast %100 : vector<1x128xf32> to vector<8x128xf32>
    %103 = arith.mulf %101, %102 : vector<8x128xf32>
    %104 = arith.addf %98, %103 : vector<8x128xf32>
    %105 = vector.extract_strided_slice %0 {offsets = [0, 16], sizes = [8, 1], strides = [1, 1]} : vector<8x23xf32> to vector<8x1xf32>
    %106 = vector.extract_strided_slice %89 {offsets = [2, 0], sizes = [1, 128], strides = [1, 1]} : vector<8x128xf32> to vector<1x128xf32>
    %107 = vector.broadcast %105 : vector<8x1xf32> to vector<8x128xf32>
    %108 = vector.broadcast %106 : vector<1x128xf32> to vector<8x128xf32>
    %109 = arith.mulf %107, %108 : vector<8x128xf32>
    %110 = arith.addf %104, %109 : vector<8x128xf32>
    %111 = vector.extract_strided_slice %0 {offsets = [0, 17], sizes = [8, 1], strides = [1, 1]} : vector<8x23xf32> to vector<8x1xf32>
    %112 = vector.extract_strided_slice %89 {offsets = [3, 0], sizes = [1, 128], strides = [1, 1]} : vector<8x128xf32> to vector<1x128xf32>
    %113 = vector.broadcast %111 : vector<8x1xf32> to vector<8x128xf32>
    %114 = vector.broadcast %112 : vector<1x128xf32> to vector<8x128xf32>
    %115 = arith.mulf %113, %114 : vector<8x128xf32>
    %116 = arith.addf %110, %115 : vector<8x128xf32>
    %117 = vector.extract_strided_slice %0 {offsets = [0, 18], sizes = [8, 1], strides = [1, 1]} : vector<8x23xf32> to vector<8x1xf32>
    %118 = vector.extract_strided_slice %89 {offsets = [4, 0], sizes = [1, 128], strides = [1, 1]} : vector<8x128xf32> to vector<1x128xf32>
    %119 = vector.broadcast %117 : vector<8x1xf32> to vector<8x128xf32>
    %120 = vector.broadcast %118 : vector<1x128xf32> to vector<8x128xf32>
    %121 = arith.mulf %119, %120 : vector<8x128xf32>
    %122 = arith.addf %116, %121 : vector<8x128xf32>
    %123 = vector.extract_strided_slice %0 {offsets = [0, 19], sizes = [8, 1], strides = [1, 1]} : vector<8x23xf32> to vector<8x1xf32>
    %124 = vector.extract_strided_slice %89 {offsets = [5, 0], sizes = [1, 128], strides = [1, 1]} : vector<8x128xf32> to vector<1x128xf32>
    %125 = vector.broadcast %123 : vector<8x1xf32> to vector<8x128xf32>
    %126 = vector.broadcast %124 : vector<1x128xf32> to vector<8x128xf32>
    %127 = arith.mulf %125, %126 : vector<8x128xf32>
    %128 = arith.addf %122, %127 : vector<8x128xf32>
    %129 = vector.extract_strided_slice %0 {offsets = [0, 20], sizes = [8, 1], strides = [1, 1]} : vector<8x23xf32> to vector<8x1xf32>
    %130 = vector.extract_strided_slice %89 {offsets = [6, 0], sizes = [1, 128], strides = [1, 1]} : vector<8x128xf32> to vector<1x128xf32>
    %131 = vector.broadcast %129 : vector<8x1xf32> to vector<8x128xf32>
    %132 = vector.broadcast %130 : vector<1x128xf32> to vector<8x128xf32>
    %133 = arith.mulf %131, %132 : vector<8x128xf32>
    %134 = arith.addf %128, %133 : vector<8x128xf32>
    %135 = vector.extract_strided_slice %0 {offsets = [0, 21], sizes = [8, 1], strides = [1, 1]} : vector<8x23xf32> to vector<8x1xf32>
    %136 = vector.extract_strided_slice %89 {offsets = [7, 0], sizes = [1, 128], strides = [1, 1]} : vector<8x128xf32> to vector<1x128xf32>
    %137 = vector.broadcast %135 : vector<8x1xf32> to vector<8x128xf32>
    %138 = vector.broadcast %136 : vector<1x128xf32> to vector<8x128xf32>
    %139 = arith.mulf %137, %138 : vector<8x128xf32>
    %140 = arith.addf %134, %139 : vector<8x128xf32>
    %141 = vector.extract_strided_slice %140 {offsets = [0, 0], sizes = [2, 128], strides = [1, 1]} : vector<8x128xf32> to vector<2x128xf32>
    %c0_6 = arith.constant 0 : index
    %c0_7 = arith.constant 0 : index
    %142 = vector.load %arg3[%c0_6, %c0_7] : memref<2x128xf32, #tpu.memory_space<vmem>>, vector<2x128xf32>
    tpu.vector_store %arg3[%c0_6, %c0_7], %141 {strides = array<i32>} : memref<2x128xf32, #tpu.memory_space<vmem>>, vector<2x128xf32>,
    return
  }
  func.func @transform_0(%arg0: i32) -> (i32, i32) {
    %c0_i32 = arith.constant 0 : i32
    %c0_i32_0 = arith.constant 0 : i32
    %c0_i32_1 = arith.constant 0 : i32
    return %c0_i32, %c0_i32_0 : i32, i32
  }
  func.func @transform_1(%arg0: i32) -> (i32, i32) {
    %c0_i32 = arith.constant 0 : i32
    %c0_i32_0 = arith.constant 0 : i32
    return %c0_i32, %arg0 : i32, i32
  }
  func.func @transform_2(%arg0: i32) -> (i32, i32) {
    %c0_i32 = arith.constant 0 : i32
    %c0_i32_0 = arith.constant 0 : i32
    return %c0_i32, %arg0 : i32, i32
  }
}

</mosaic_0001>

<llo_original>
// kernel: tpu_custom_call.1
$region0: #{tpu_custom_call.1}
  #allocation0 [shape = 'u32[]', space=smem, size = 0x4, offset = 0x4, fixed_abs, tag = 'smem constant byte address 0x4 - core index']
  #allocation1 [shape = 'u32[144,128]{1,0:T(1,128)}', space=vmem, size = 0x12000, scoped, tag = 'internal scratch']
  %s0 = inlined_call_operand.hbm [shape: f32[8,23], index: 0, kind: input, shape index: {}]
  %s1 = inlined_call_operand.hbm [shape: f32[4,16], index: 1, kind: input, shape index: {}]
  %s2 = inlined_call_operand.hbm [shape: f32[2,16], index: 2, kind: output, shape index: {}]
  %s3 = sld [smem:[#allocation0]]
  $region26: #{tpu_custom_call.1} parent=0
    _
  %s5 = ssub.s32 1, %s3
  %s6 = scalar_select 0, %s5, %s3
  $region1: #{tpu_custom_call.1} parent=0
    #allocation2 [shape = 'u8[4096]{0}', space=vmem, size = 0x1000, scoped, tag = 'input window, operand 0, single buffered']
    #allocation3 [shape = 's32[1]{0}', space=sflag, size = 0x4, scoped, tag = 'scoped memory for tpu_custom_call.1']
    #allocation4 [shape = 's32[1]{0}', space=sflag, size = 0x4, scoped, tag = 'scoped memory for tpu_custom_call.1']
    #allocation5 [shape = 'u8[2048]{0}', space=vmem, size = 0x800, scoped, tag = 'input window, operand 1, single buffered']
    #allocation6 [shape = 's32[1]{0}', space=sflag, size = 0x4, scoped, tag = 'scoped memory for tpu_custom_call.1']
    #allocation7 [shape = 'u8[1024]{0}', space=vmem, size = 0x400, scoped, tag = 'output window, operand 0, single buffered']
    %7 = vsyncpa [#allocation3], 0
    %8 = vsyncpa [#allocation6], 0
    %9 = vsyncpa [#allocation4], 0
    // Predicated region
    $region2: #{tpu_custom_call.1} parent=1 // pred_check
      _
    $region3: #{tpu_custom_call.1} parent=1 // pred_check_branch
      %11 = sbr.rel (0) target = $region5
    $region4: #{tpu_custom_call.1} parent=1 // pred_region
      %s13 = ssub.s32 128, 128
      %14 = vsyncadd [#allocation3], %s13
      %s16 = sshll.u32 [#allocation2], 4
      %s17 = int_to_ptr.vmem [resolvable:$true] %s16
      %19 = dma.hbm_to_vmem [thread:$0]  %s0, 128, %s17, [#allocation3]
    $region5: #{tpu_custom_call.1} parent=1 // pred_fallthru
      _
    // Predicated region
    $region6: #{tpu_custom_call.1} parent=1 // pred_check
      _
    $region7: #{tpu_custom_call.1} parent=1 // pred_check_branch
      %21 = sbr.rel (0) target = $region9
    $region8: #{tpu_custom_call.1} parent=1 // pred_region
      %s23 = ssub.s32 64, 64
      %24 = vsyncadd [#allocation6], %s23
      %s26 = sshll.u32 [#allocation5], 4
      %s27 = int_to_ptr.vmem [resolvable:$true] %s26
      %29 = dma.hbm_to_vmem [thread:$0]  %s1, 64, %s27, [#allocation6]
    $region9: #{tpu_custom_call.1} parent=1 // pred_fallthru
      _
    // Predicated region
    $region10: #{tpu_custom_call.1} parent=1 // pred_check
      _
    $region11: #{tpu_custom_call.1} parent=1 // pred_check_branch
      %31 = sbr.rel (0) target = $region13
    $region12: #{tpu_custom_call.1} parent=1 // pred_region
      %32 = dma.done [#allocation3], 128
    $region13: #{tpu_custom_call.1} parent=1 // pred_fallthru
      _
    // Predicated region
    $region14: #{tpu_custom_call.1} parent=1 // pred_check
      _
    $region15: #{tpu_custom_call.1} parent=1 // pred_check_branch
      %34 = sbr.rel (0) target = $region17
    $region16: #{tpu_custom_call.1} parent=1 // pred_region
      %35 = dma.done [#allocation6], 64
    $region17: #{tpu_custom_call.1} parent=1 // pred_fallthru
      _
    %v36 = vld [vmem:[#allocation2] sm:$0xff]
    %v37 = vld [vmem:[#allocation5] sm:$0xf]
    %39 = vset.pattern.permute.xlu0 4
    %40 = vperm.xlu0 %39, %v36
    %v41 = vpop.permute.xlu0 %40
    %43 = vset.pattern.permute.xlu0 0
    %44 = vperm.xlu0 %43, %v36
    %v45 = vpop.permute.xlu0 %44
    %v47 = vlaneseq
    %v48 = vshrl.u32 %v47, 7
    %v49 = vsub.s32 0, %v48
    %v50 = vrot.slane %v37, %v49
    %v51 = vmul.f32 %v45, %v50
    %v52 = vadd.f32 %v41, %v51
    %53 = vset.pattern.permute.xlu0 1
    %54 = vperm.xlu0 %53, %v36
    %v55 = vpop.permute.xlu0 %54
    %v57 = vlaneseq
    %v58 = vshrl.u32 %v57, 7
    %v59 = vsub.s32 1, %v58
    %v60 = vrot.slane %v37, %v59
    %v61 = vmul.f32 %v55, %v60
    %v62 = vadd.f32 %v52, %v61
    %63 = vset.pattern.permute.xlu0 2
    %64 = vperm.xlu0 %63, %v36
    %v65 = vpop.permute.xlu0 %64
    %v67 = vlaneseq
    %v68 = vshrl.u32 %v67, 7
    %v69 = vsub.s32 2, %v68
    %v70 = vrot.slane %v37, %v69
    %v71 = vmul.f32 %v65, %v70
    %v72 = vadd.f32 %v62, %v71
    %73 = vset.pattern.permute.xlu0 3
    %74 = vperm.xlu0 %73, %v36
    %v75 = vpop.permute.xlu0 %74
    %v77 = vlaneseq
    %v78 = vshrl.u32 %v77, 7
    %v79 = vsub.s32 3, %v78
    %v80 = vrot.slane %v37, %v79
    %v81 = vmul.f32 %v75, %v80
    %v82 = vadd.f32 %v72, %v81
    %vm83 = vcmp.gt.f32.partialorder %v82, 0.0
    %v84 = vmul.f32 %v82, 0.2
    %v85 = vsel %vm83, %v82, %v84
    %86 = vset.pattern.permute.xlu0 13
    %87 = vperm.xlu0 %86, %v36
    %v88 = vpop.permute.xlu0 %87
    %90 = vset.pattern.permute.xlu0 5
    %91 = vperm.xlu0 %90, %v36
    %v92 = vpop.permute.xlu0 %91
    %v94 = vlaneseq
    %v95 = vshrl.u32 %v94, 7
    %v96 = vsub.s32 0, %v95
    %v97 = vrot.slane %v85, %v96
    %v98 = vmul.f32 %v92, %v97
    %v99 = vadd.f32 %v88, %v98
    %100 = vset.pattern.permute.xlu0 6
    %101 = vperm.xlu0 %100, %v36
    %v102 = vpop.permute.xlu0 %101
    %v104 = vlaneseq
    %v105 = vshrl.u32 %v104, 7
    %v106 = vsub.s32 1, %v105
    %v107 = vrot.slane %v85, %v106
    %v108 = vmul.f32 %v102, %v107
    %v109 = vadd.f32 %v99, %v108
    %110 = vset.pattern.permute.xlu0 7
    %111 = vperm.xlu0 %110, %v36
    %v112 = vpop.permute.xlu0 %111
    %v114 = vlaneseq
    %v115 = vshrl.u32 %v114, 7
    %v116 = vsub.s32 2, %v115
    %v117 = vrot.slane %v85, %v116
    %v118 = vmul.f32 %v112, %v117
    %v119 = vadd.f32 %v109, %v118
    %120 = vset.pattern.permute.xlu0 8
    %121 = vperm.xlu0 %120, %v36
    %v122 = vpop.permute.xlu0 %121
    %v124 = vlaneseq
    %v125 = vshrl.u32 %v124, 7
    %v126 = vsub.s32 3, %v125
    %v127 = vrot.slane %v85, %v126
    %v128 = vmul.f32 %v122, %v127
    %v129 = vadd.f32 %v119, %v128
    %130 = vset.pattern.permute.xlu0 9
    %131 = vperm.xlu0 %130, %v36
    %v132 = vpop.permute.xlu0 %131
    %v134 = vlaneseq
    %v135 = vshrl.u32 %v134, 7
    %v136 = vsub.s32 4, %v135
    %v137 = vrot.slane %v85, %v136
    %v138 = vmul.f32 %v132, %v137
    %v139 = vadd.f32 %v129, %v138
    %140 = vset.pattern.permute.xlu0 10
    %141 = vperm.xlu0 %140, %v36
    %v142 = vpop.permute.xlu0 %141
    %v144 = vlaneseq
    %v145 = vshrl.u32 %v144, 7
    %v146 = vsub.s32 5, %v145
    %v147 = vrot.slane %v85, %v146
    %v148 = vmul.f32 %v142, %v147
    %v149 = vadd.f32 %v139, %v148
    %150 = vset.pattern.permute.xlu0 11
    %151 = vperm.xlu0 %150, %v36
    %v152 = vpop.permute.xlu0 %151
    %v154 = vlaneseq
    %v155 = vshrl.u32 %v154, 7
    %v156 = vsub.s32 6, %v155
    %v157 = vrot.slane %v85, %v156
    %v158 = vmul.f32 %v152, %v157
    %v159 = vadd.f32 %v149, %v158
    %160 = vset.pattern.permute.xlu0 12
    %161 = vperm.xlu0 %160, %v36
    %v162 = vpop.permute.xlu0 %161
    %v164 = vlaneseq
    %v165 = vshrl.u32 %v164, 7
    %v166 = vsub.s32 7, %v165
    %v167 = vrot.slane %v85, %v166
    %v168 = vmul.f32 %v162, %v167
    %v169 = vadd.f32 %v159, %v168
    %vm170 = vcmp.gt.f32.partialorder %v169, 0.0
    %v171 = vmul.f32 %v169, 0.2
    %v172 = vsel %vm170, %v169, %v171
    %173 = vset.pattern.permute.xlu0 22
    %174 = vperm.xlu0 %173, %v36
    %v175 = vpop.permute.xlu0 %174
    %177 = vset.pattern.permute.xlu0 14
    %178 = vperm.xlu0 %177, %v36
    %v179 = vpop.permute.xlu0 %178
    %v181 = vlaneseq
    %v182 = vshrl.u32 %v181, 7
    %v183 = vsub.s32 0, %v182
    %v184 = vrot.slane %v172, %v183
    %v185 = vmul.f32 %v179, %v184
    %v186 = vadd.f32 %v175, %v185
    %187 = vset.pattern.permute.xlu0 15
    %188 = vperm.xlu0 %187, %v36
    %v189 = vpop.permute.xlu0 %188
    %v191 = vlaneseq
    %v192 = vshrl.u32 %v191, 7
    %v193 = vsub.s32 1, %v192
    %v194 = vrot.slane %v172, %v193
    %v195 = vmul.f32 %v189, %v194
    %v196 = vadd.f32 %v186, %v195
    %197 = vset.pattern.permute.xlu0 16
    %198 = vperm.xlu0 %197, %v36
    %v199 = vpop.permute.xlu0 %198
    %v201 = vlaneseq
    %v202 = vshrl.u32 %v201, 7
    %v203 = vsub.s32 2, %v202
    %v204 = vrot.slane %v172, %v203
    %v205 = vmul.f32 %v199, %v204
    %v206 = vadd.f32 %v196, %v205
    %207 = vset.pattern.permute.xlu0 17
    %208 = vperm.xlu0 %207, %v36
    %v209 = vpop.permute.xlu0 %208
    %v211 = vlaneseq
    %v212 = vshrl.u32 %v211, 7
    %v213 = vsub.s32 3, %v212
    %v214 = vrot.slane %v172, %v213
    %v215 = vmul.f32 %v209, %v214
    %v216 = vadd.f32 %v206, %v215
    %217 = vset.pattern.permute.xlu0 18
    %218 = vperm.xlu0 %217, %v36
    %v219 = vpop.permute.xlu0 %218
    %v221 = vlaneseq
    %v222 = vshrl.u32 %v221, 7
    %v223 = vsub.s32 4, %v222
    %v224 = vrot.slane %v172, %v223
    %v225 = vmul.f32 %v219, %v224
    %v226 = vadd.f32 %v216, %v225
    %227 = vset.pattern.permute.xlu0 19
    %228 = vperm.xlu0 %227, %v36
    %v229 = vpop.permute.xlu0 %228
    %v231 = vlaneseq
    %v232 = vshrl.u32 %v231, 7
    %v233 = vsub.s32 5, %v232
    %v234 = vrot.slane %v172, %v233
    %v235 = vmul.f32 %v229, %v234
    %v236 = vadd.f32 %v226, %v235
    %237 = vset.pattern.permute.xlu0 20
    %238 = vperm.xlu0 %237, %v36
    %v239 = vpop.permute.xlu0 %238
    %v241 = vlaneseq
    %v242 = vshrl.u32 %v241, 7
    %v243 = vsub.s32 6, %v242
    %v244 = vrot.slane %v172, %v243
    %v245 = vmul.f32 %v239, %v244
    %v246 = vadd.f32 %v236, %v245
    %247 = vset.pattern.permute.xlu0 21
    %248 = vperm.xlu0 %247, %v36
    %v249 = vpop.permute.xlu0 %248
    %v251 = vlaneseq
    %v252 = vshrl.u32 %v251, 7
    %v253 = vsub.s32 7, %v252
    %v254 = vrot.slane %v172, %v253
    %v255 = vmul.f32 %v249, %v254
    %v256 = vadd.f32 %v246, %v255
    %257 = vst [vmem:[#allocation7] sm:$0x3] %v256
    // Predicated region
    $region18: #{tpu_custom_call.1} parent=1 // pred_check
      _
    $region19: #{tpu_custom_call.1} parent=1 // pred_check_branch
      %259 = sbr.rel (0) target = $region21
    $region20: #{tpu_custom_call.1} parent=1 // pred_region
      %s261 = ssub.s32 32, 32
      %262 = vsyncadd [#allocation4], %s261
      %s264 = sshll.u32 [#allocation7], 4
      %s265 = int_to_ptr.vmem [resolvable:$true] %s264
      %267 = dma.vmem_to_hbm [thread:$0]  %s265, 32, %s2, [#allocation4]
    $region21: #{tpu_custom_call.1} parent=1 // pred_fallthru
      _
    // Predicated region
    $region22: #{tpu_custom_call.1} parent=1 // pred_check
      _
    $region23: #{tpu_custom_call.1} parent=1 // pred_check_branch
      %269 = sbr.rel (0) target = $region25
    $region24: #{tpu_custom_call.1} parent=1 // pred_region
      %270 = dma.done [#allocation4], 32
    $region25: #{tpu_custom_call.1} parent=1 // pred_fallthru
      _
    %271 = vsyncpa [#allocation3], 1
    %272 = vsyncpa [#allocation6], 1
    %273 = vsyncpa [#allocation4], 1

</llo_original>
